<compile_context>
chip_gen: v5e
topology: v5e:2x2
jax: 0.10.0
libtpu: 0.0.40
codegen_flags: <defaults>
</compile_context>

<pallas_src>
import functools

import jax
import jax.numpy as jnp
from jax.experimental import pallas as pl
from jax.experimental.pallas import tpu as pltpu


def _round_up(x, m):
    return ((x + m - 1) // m) * m


def _vmem_budget_and_cap():
    """Generation-aware usable-VMEM budget (bytes) and physical capacity."""
    try:
        cap = int(pltpu.get_tpu_info().vmem_capacity_bytes)
    except Exception:
        cap = 64 << 20  # conservative fallback (v7x per-TC VMEM)
    headroom = 12 << 20  # compiler-internal scratch / spill headroom
    return max(cap - headroom, 8 << 20), cap


def _resident_kernel(mm_dtype, h_ref, w_ref, b_ref, o_ref):
    """Fused self-loop matmul + exact residual + bias + ReLU (resident weight)."""
    h = h_ref[...]                                   # stays in HBM dtype (f32)
    acc = jnp.dot(h.astype(mm_dtype), w_ref[...],    # MXU, f32 accumulation
                  preferred_element_type=jnp.float32)
    node = acc + h.astype(jnp.float32) + b_ref[...]  # propagate() == identity
    o_ref[...] = jnp.maximum(node, 0.0).astype(o_ref.dtype)


def _coltiled_kernel(mm_dtype, h_ref, hres_ref, w_ref, b_ref, o_ref):
    """Same fusion, weight tiled over output-column blocks (large D)."""
    acc = jnp.dot(h_ref[...].astype(mm_dtype), w_ref[...],
                  preferred_element_type=jnp.float32)
    node = acc + hres_ref[...].astype(jnp.float32) + b_ref[...]
    o_ref[...] = jnp.maximum(node, 0.0).astype(o_ref.dtype)


@functools.partial(
    jax.jit,
    static_argnames=("tile_n", "col_tile", "compute_dtype", "out_dtype",
                     "max_resident_bytes"))
def rgcn_layer_forward(h, loop_weight, bias, *, tile_n=None, col_tile=None,
                       compute_dtype=None, out_dtype=None,
                       max_resident_bytes=None):
    """h: [N, D], loop_weight: [D, D], bias: [D]  ->  [N, D] (out_dtype)."""
    N, D_in = h.shape
    Dw_in, D_out = loop_weight.shape
    assert Dw_in == D_in, "loop_weight must be [in_feat, out_feat]"
    assert bias.shape == (D_out,)
    assert D_in == D_out, "self-loop residual + bias require in_feat == out_feat"

    mm_dtype = jnp.dtype(compute_dtype if compute_dtype is not None else h.dtype)
    out_dt = jnp.dtype(out_dtype if out_dtype is not None else h.dtype)
    h_item = jnp.dtype(h.dtype).itemsize
    w_item = mm_dtype.itemsize
    o_item = out_dt.itemsize

    # Only the small operands are touched in the wrapper; h streams untouched.
    w_c = loop_weight.astype(mm_dtype)
    b_c = bias.astype(jnp.float32).reshape(1, D_out)

    # Sublane-packing row multiple for h's stored dtype (8 f32 / 16 bf16 / 32 i8).
    row_mult = int(8 * max(1, 4 // h_item))

    budget, vmem_cap = _vmem_budget_and_cap()

    # Node tile: grow toward roofline-saturating sizes when VMEM allows.
    want_tile = 2048 if tile_n is None else int(tile_n)
    tile_rows = min(_round_up(want_tile, row_mult), _round_up(N, row_mult))

    def resident_need(t):
        return (2 * t * D_in * h_item        # double-buffered h tile
                + 2 * D_in * D_out * w_item  # resident weight (conservative 2x)
                + 2 * D_out * 4              # bias
                + 2 * t * D_out * o_item     # double-buffered output tile
                + t * D_out * 4)             # in-kernel f32 intermediate

    t = tile_rows
    while resident_need(t) > budget and t > row_mult:
        t = max(row_mult, _round_up(t // 2, row_mult))
    resident_ok = resident_need(t) <= budget
    if (max_resident_bytes is not None
            and D_in * D_out * w_item > max_resident_bytes):
        resident_ok = False

    if resident_ok:
        # ---- Mode A: weight resident in VMEM, 1-D grid over node tiles. ----
        grid = (pl.cdiv(N, t),)
        need = resident_need(t)
        vmem_limit = int(min(vmem_cap, max(need + (8 << 20), 32 << 20)))
        cost = pl.CostEstimate(
            flops=2 * N * D_in * D_out,
            transcendentals=0,
            bytes_accessed=int(N * D_in * h_item + D_in * D_out * w_item
                               + D_out * 4 + N * D_out * o_item))
        return pl.pallas_call(
            functools.partial(_resident_kernel, mm_dtype),
            out_shape=jax.ShapeDtypeStruct((N, D_out), out_dt),
            grid_spec=pltpu.PrefetchScalarGridSpec(
                num_scalar_prefetch=0,
                grid=grid,
                in_specs=[
                    pl.BlockSpec((t, D_in), lambda i: (i, 0)),      # h tile
                    pl.BlockSpec((D_in, D_out), lambda i: (0, 0)),  # resident W
                    pl.BlockSpec((1, D_out), lambda i: (0, 0)),     # bias
                ],
                out_specs=pl.BlockSpec((t, D_out), lambda i: (i, 0)),
            ),
            compiler_params=pltpu.CompilerParams(
                dimension_semantics=("parallel",),   # node axis -> megacore
                vmem_limit_bytes=vmem_limit),
            cost_estimate=cost,
        )(h, w_c, b_c)

    # ---- Mode B: column-tiled weight (large D), 2-D grid (node, col). ----
    tn = 512 if col_tile is None else int(col_tile)
    if tn >= D_out:
        tn = D_out                      # full dim always legal
    else:
        tn = max(128, (tn // 128) * 128)  # lane-aligned column block

    t = tile_rows

    def col_need(t, tn):
        return (2 * t * D_in * h_item        # h slab (matmul operand)
                + 2 * D_in * tn * w_item     # weight column block
                + 2 * t * tn * h_item        # h residual column block
                + 2 * tn * 4                 # bias block
                + 2 * t * tn * o_item        # output block
                + t * tn * 4)                # f32 intermediate

    while col_need(t, tn) > budget and (t > row_mult or tn > 128):
        if t >= tn and t > row_mult:
            t = max(row_mult, _round_up(t // 2, row_mult))
        elif tn > 128:
            tn = max(128, (tn // 2 // 128) * 128)
        else:
            t = max(row_mult, _round_up(t // 2, row_mult))

    grid = (pl.cdiv(N, t), pl.cdiv(D_out, tn))
    need = col_need(t, tn)
    vmem_limit = int(min(vmem_cap, max(need + (8 << 20), 32 << 20)))
    cost = pl.CostEstimate(
        flops=2 * N * D_in * D_out,
        transcendentals=0,
        bytes_accessed=int(N * D_in * h_item + N * D_out * h_item
                           + pl.cdiv(N, t) * D_in * D_out * w_item
                           + D_out * 4 + N * D_out * o_item))
    return pl.pallas_call(
        functools.partial(_coltiled_kernel, mm_dtype),
        out_shape=jax.ShapeDtypeStruct((N, D_out), out_dt),
        grid_spec=pltpu.PrefetchScalarGridSpec(
            num_scalar_prefetch=0,
            grid=grid,
            in_specs=[
                pl.BlockSpec((t, D_in), lambda i, j: (i, 0)),   # h (matmul)
                pl.BlockSpec((t, tn), lambda i, j: (i, j)),     # h residual cols
                pl.BlockSpec((D_in, tn), lambda i, j: (0, j)),  # W column block
                pl.BlockSpec((1, tn), lambda i, j: (0, j)),     # bias cols
            ],
            out_specs=pl.BlockSpec((t, tn), lambda i, j: (i, j)),
        ),
        compiler_params=pltpu.CompilerParams(
            dimension_semantics=("parallel", "arbitrary"),
            vmem_limit_bytes=vmem_limit),
        cost_estimate=cost,
    )(h, h, w_c, b_c)


def xavier_uniform(key, shape, gain):
    """Deterministic xavier_uniform_ matching torch.nn.init semantics."""
    fan_in, fan_out = shape[0], shape[1]
    a = gain * jnp.sqrt(6.0 / (fan_in + fan_out))
    return jax.random.uniform(key, shape, jnp.float32, minval=-a, maxval=a)


def reference_forward(h, loop_weight, bias):
    loop_message = h @ loop_weight
    node_repr = h + bias + loop_message
    return jnp.maximum(node_repr, 0.0)


if __name__ == "__main__":
    # Small shapes consistent with the module: N nodes, in_feat == out_feat.
    N, D = 200, 32
    gain = float(jnp.sqrt(2.0))  # calculate_gain('relu')

    key = jax.random.PRNGKey(0)
    k_h, k_w, k_b, k_h2, k_w2, k_b2 = jax.random.split(key, 6)

    h = jax.random.normal(k_h, (N, D), dtype=jnp.float32)
    loop_weight = xavier_uniform(k_w, (D, D), gain)
    # torch code calls xavier_uniform_ on a 1-D bias; init deterministically as
    # a row of an equivalent (1, D) xavier draw.
    bias = xavier_uniform(k_b, (1, D), gain)[0]

    ref = reference_forward(h, loop_weight, bias)

    # f32 path, resident weight (module-faithful precision, no wrapper passes).
    out = jax.block_until_ready(rgcn_layer_forward(h, loop_weight, bias))
    assert out.shape == (N, D) and out.dtype == jnp.float32
    assert jnp.allclose(out, ref, atol=1e-4, rtol=1e-4), "f32 mismatch"

    # Partial last node tile: exercises grid = cdiv(N, tile) with no N padding.
    out_t = jax.block_until_ready(
        rgcn_layer_forward(h, loop_weight, bias, tile_n=128))
    assert jnp.allclose(out_t, ref, atol=1e-4, rtol=1e-4), "partial-tile mismatch"

    # bf16 MXU operands + bf16 output stream; h stays f32 in HBM, residual exact.
    out_bf16 = jax.block_until_ready(
        rgcn_layer_forward(h, loop_weight, bias,
                           compute_dtype=jnp.bfloat16, out_dtype=jnp.bfloat16))
    assert out_bf16.shape == (N, D) and out_bf16.dtype == jnp.bfloat16
    assert float(jnp.max(jnp.abs(out_bf16.astype(jnp.float32) - ref))) < 0.2, \
        "bf16 mismatch"

    # Column-tiled weight path (large-D fallback), forced at a small shape.
    N2, D2 = 200, 256
    h2 = jax.random.normal(k_h2, (N2, D2), dtype=jnp.float32)
    w2 = xavier_uniform(k_w2, (D2, D2), gain)
    b2 = xavier_uniform(k_b2, (1, D2), gain)[0]
    out_a = jax.block_until_ready(rgcn_layer_forward(h2, w2, b2))
    out_b = jax.block_until_ready(
        rgcn_layer_forward(h2, w2, b2, max_resident_bytes=0, col_tile=128))
    assert out_b.shape == (N2, D2)
    assert jnp.allclose(out_b, out_a, atol=1e-4, rtol=1e-4), \
        "column-tiled vs resident mismatch"
    assert float(jnp.max(jnp.abs(out_a - reference_forward(h2, w2, b2)))) < 0.1

    print("KERNEL_OK")
</pallas_src>

<mosaic_0001>
module attributes {stable_mosaic.version = 11 : i64} {
  func.func @_resident_kernel(%arg0: i32, %arg1: memref<200x32xf32, #tpu.memory_space<vmem>>, %arg2: memref<32x32xf32, #tpu.memory_space<vmem>>, %arg3: memref<1x32xf32, #tpu.memory_space<vmem>>, %arg4: memref<200x32xf32, #tpu.memory_space<vmem>>) attributes {dimension_semantics = [#tpu.dimension_semantics<parallel>], iteration_bounds = array<i64: 1>, scalar_prefetch = 0 : i64, scratch_operands = 0 : i64, tpu.core_type = #tpu.core_type<tc>, window_params = [{transform_indices = @transform_0, window_bounds = array<i64: 200, 32>}, {pipeline_mode = #tpu.pipeline_mode<synchronous>, transform_indices = @transform_1, window_bounds = array<i64: 32, 32>}, {pipeline_mode = #tpu.pipeline_mode<synchronous>, transform_indices = @transform_2, window_bounds = array<i64: 1, 32>}, {transform_indices = @transform_3, window_bounds = array<i64: 200, 32>}]} {
    %c0 = arith.constant 0 : index
    %c0_0 = arith.constant 0 : index
    %0 = vector.load %arg1[%c0, %c0_0] : memref<200x32xf32, #tpu.memory_space<vmem>>, vector<200x32xf32>
    %c0_1 = arith.constant 0 : index
    %c0_2 = arith.constant 0 : index
    %1 = vector.load %arg2[%c0_1, %c0_2] : memref<32x32xf32, #tpu.memory_space<vmem>>, vector<32x32xf32>
    %cst = arith.constant dense<0.000000e+00> : vector<200x32xf32>
    %2 = tpu.matmul %0, %1, %cst {dimension_numbers = #tpu.dot_dimension_numbers<[1], [0], [0], [1], [0, 0, 1, 1], [], []>} : vector<200x32xf32>, vector<32x32xf32>, vector<200x32xf32> -> vector<200x32xf32>
    %3 = arith.addf %2, %0 : vector<200x32xf32>
    %c0_3 = arith.constant 0 : index
    %c0_4 = arith.constant 0 : index
    %4 = vector.load %arg3[%c0_3, %c0_4] : memref<1x32xf32, #tpu.memory_space<vmem>>, vector<1x32xf32>
    %5 = vector.broadcast %4 : vector<1x32xf32> to vector<200x32xf32>
    %6 = arith.addf %3, %5 : vector<200x32xf32>
    %cst_5 = arith.constant 0.000000e+00 : f32
    %7 = vector.broadcast %cst_5 : f32 to vector<200x32xf32>
    %8 = arith.maximumf %6, %7 : vector<200x32xf32>
    %c0_6 = arith.constant 0 : index
    %c0_7 = arith.constant 0 : index
    %9 = vector.load %arg4[%c0_6, %c0_7] : memref<200x32xf32, #tpu.memory_space<vmem>>, vector<200x32xf32>
    tpu.vector_store %arg4[%c0_6, %c0_7], %8 {strides = array<i32>} : memref<200x32xf32, #tpu.memory_space<vmem>>, vector<200x32xf32>,
    return
  }
  func.func @transform_0(%arg0: i32) -> (i32, i32) {
    %c0_i32 = arith.constant 0 : i32
    %c0_i32_0 = arith.constant 0 : i32
    return %arg0, %c0_i32 : i32, i32
  }
  func.func @transform_1(%arg0: i32) -> (i32, i32) {
    %c0_i32 = arith.constant 0 : i32
    %c0_i32_0 = arith.constant 0 : i32
    %c0_i32_1 = arith.constant 0 : i32
    return %c0_i32, %c0_i32_0 : i32, i32
  }
  func.func @transform_2(%arg0: i32) -> (i32, i32) {
    %c0_i32 = arith.constant 0 : i32
    %c0_i32_0 = arith.constant 0 : i32
    %c0_i32_1 = arith.constant 0 : i32
    return %c0_i32, %c0_i32_0 : i32, i32
  }
  func.func @transform_3(%arg0: i32) -> (i32, i32) {
    %c0_i32 = arith.constant 0 : i32
    %c0_i32_0 = arith.constant 0 : i32
    return %arg0, %c0_i32 : i32, i32
  }
}

</mosaic_0001>

<llo_original>
// kernel: rgcn_layer_forward.1
$region0: #{rgcn_layer_forward.1}
  #allocation0 [shape = 'u32[]', space=smem, size = 0x4, offset = 0x4, fixed_abs, tag = 'smem constant byte address 0x4 - core index']
  #allocation1 [shape = 'u32[72,128]{1,0:T(1,128)}', space=vmem, size = 0x9000, scoped, tag = 'internal scratch']
  %s0 = inlined_call_operand.vmem [shape: f32[200,32], index: 0, kind: input, shape index: {}]
  %s1 = inlined_call_operand.vmem [shape: f32[32,32], index: 1, kind: input, shape index: {}]
  %s2 = inlined_call_operand.vmem [shape: f32[1,32], index: 2, kind: input, shape index: {}]
  %s3 = inlined_call_operand.vmem [shape: f32[200,32], index: 3, kind: output, shape index: {}]
  %s4 = sld [smem:[#allocation0]]
  $region22: #{rgcn_layer_forward.1} parent=0
    _
  %s6 = ssub.s32 1, %s4
  %s7 = scalar_select 0, %s6, %s4
  // Predicated region
  $region2: #{rgcn_layer_forward.1} parent=0 // pred_check
    _
  $region3: #{rgcn_layer_forward.1} parent=0 // pred_check_branch
    %9 = sbr.rel (0) target = $region5
  $region4: #{rgcn_layer_forward.1} parent=0 // pred_region
    _
  $region5: #{rgcn_layer_forward.1} parent=0 // pred_fallthru
    _
  // Predicated region
  $region6: #{rgcn_layer_forward.1} parent=0 // pred_check
    _
  $region7: #{rgcn_layer_forward.1} parent=0 // pred_check_branch
    %11 = sbr.rel (0) target = $region9
  $region8: #{rgcn_layer_forward.1} parent=0 // pred_region
    _
  $region9: #{rgcn_layer_forward.1} parent=0 // pred_fallthru
    _
  // Predicated region
  $region10: #{rgcn_layer_forward.1} parent=0 // pred_check
    _
  $region11: #{rgcn_layer_forward.1} parent=0 // pred_check_branch
    %13 = sbr.rel (0) target = $region13
  $region12: #{rgcn_layer_forward.1} parent=0 // pred_region
    _
  $region13: #{rgcn_layer_forward.1} parent=0 // pred_fallthru
    _
  %v14 = vld [vmem:[%s0] sm:$0xff]
  %v15 = vld [vmem:[%s0 + $0x8] sm:$0xff]
  %v16 = vld [vmem:[%s0 + $0x10] sm:$0xff]
  %v17 = vld [vmem:[%s0 + $0x18] sm:$0xff]
  %v18 = vld [vmem:[%s0 + $0x20] sm:$0xff]
  %v19 = vld [vmem:[%s0 + $0x28] sm:$0xff]
  %v20 = vld [vmem:[%s0 + $0x30] sm:$0xff]
  %v21 = vld [vmem:[%s0 + $0x38] sm:$0xff]
  %v22 = vld [vmem:[%s0 + $0x40] sm:$0xff]
  %v23 = vld [vmem:[%s0 + $0x48] sm:$0xff]
  %v24 = vld [vmem:[%s0 + $0x50] sm:$0xff]
  %v25 = vld [vmem:[%s0 + $0x58] sm:$0xff]
  %v26 = vld [vmem:[%s0 + $0x60] sm:$0xff]
  %v27 = vld [vmem:[%s0 + $0x68] sm:$0xff]
  %v28 = vld [vmem:[%s0 + $0x70] sm:$0xff]
  %v29 = vld [vmem:[%s0 + $0x78] sm:$0xff]
  %v30 = vld [vmem:[%s0 + $0x80] sm:$0xff]
  %v31 = vld [vmem:[%s0 + $0x88] sm:$0xff]
  %v32 = vld [vmem:[%s0 + $0x90] sm:$0xff]
  %v33 = vld [vmem:[%s0 + $0x98] sm:$0xff]
  %v34 = vld [vmem:[%s0 + $0xa0] sm:$0xff]
  %v35 = vld [vmem:[%s0 + $0xa8] sm:$0xff]
  %v36 = vld [vmem:[%s0 + $0xb0] sm:$0xff]
  %v37 = vld [vmem:[%s0 + $0xb8] sm:$0xff]
  %v38 = vld [vmem:[%s0 + $0xc0] sm:$0xff]
  %v39 = vld [vmem:[%s1] sm:$0xff]
  %v40 = vld [vmem:[%s1 + $0x8] sm:$0xff]
  %v41 = vld [vmem:[%s1 + $0x10] sm:$0xff]
  %v42 = vld [vmem:[%s1 + $0x18] sm:$0xff]
  %vm43 = vcmask 261120
  %v45 = vsel %vm43, %v14, 0
  %v48 = vsel %vm43, %v15, 0
  %v51 = vsel %vm43, %v16, 0
  %v54 = vsel %vm43, %v17, 0
  %v57 = vsel %vm43, %v18, 0
  %v60 = vsel %vm43, %v19, 0
  %v63 = vsel %vm43, %v20, 0
  %v66 = vsel %vm43, %v21, 0
  %v69 = vsel %vm43, %v22, 0
  %v72 = vsel %vm43, %v23, 0
  %v75 = vsel %vm43, %v24, 0
  %v78 = vsel %vm43, %v25, 0
  %v81 = vsel %vm43, %v26, 0
  %v84 = vsel %vm43, %v27, 0
  %v87 = vsel %vm43, %v28, 0
  %v90 = vsel %vm43, %v29, 0
  %v93 = vsel %vm43, %v30, 0
  %v96 = vsel %vm43, %v31, 0
  %v99 = vsel %vm43, %v32, 0
  %v102 = vsel %vm43, %v33, 0
  %v105 = vsel %vm43, %v34, 0
  %v108 = vsel %vm43, %v35, 0
  %v111 = vsel %vm43, %v36, 0
  %v114 = vsel %vm43, %v37, 0
  %v117 = vsel %vm43, %v38, 0
  %119 = vmatpush.msra.mxu0 0.0
  %120 = vmatpush.msra.mxu0 0.0
  %121 = vmatpush.msra.mxu0 0.0
  %122 = vmatpush.msra.mxu0 0.0
  %123 = vmatpush.msra.mxu0 0.0
  %124 = vmatpush.msra.mxu0 0.0
  %125 = vmatpush.msra.mxu0 0.0
  %126 = vmatpush.msra.mxu0 0.0
  %127 = vmatpush.msra.mxu0 0.0
  %128 = vmatpush.msra.mxu0 0.0
  %129 = vmatpush.msra.mxu0 0.0
  %130 = vmatpush.msra.mxu0 0.0
  %131 = vmatpush.msra.mxu0 %v42
  %132 = vmatpush.msra.mxu0 %v41
  %133 = vmatpush.msra.mxu0 %v40
  %134 = vmatpush.msra.mxu0 %v39
  %135 = vmatmul.f32.gmra.mxu0 %v45
  %v136 = vpop.f32.mrf.mxu0
  %v137 = vadd.f32 %v14, %v136
  %138 = vmatmul.f32.gmra.mxu0 %v48
  %v139 = vpop.f32.mrf.mxu0
  %v140 = vadd.f32 %v15, %v139
  %141 = vmatmul.f32.gmra.mxu0 %v51
  %v142 = vpop.f32.mrf.mxu0
  %v143 = vadd.f32 %v16, %v142
  %144 = vmatmul.f32.gmra.mxu0 %v54
  %v145 = vpop.f32.mrf.mxu0
  %v146 = vadd.f32 %v17, %v145
  %147 = vmatmul.f32.gmra.mxu0 %v57
  %v148 = vpop.f32.mrf.mxu0
  %v149 = vadd.f32 %v18, %v148
  %150 = vmatmul.f32.gmra.mxu0 %v60
  %v151 = vpop.f32.mrf.mxu0
  %v152 = vadd.f32 %v19, %v151
  %153 = vmatmul.f32.gmra.mxu0 %v63
  %v154 = vpop.f32.mrf.mxu0
  %v155 = vadd.f32 %v20, %v154
  %156 = vmatmul.f32.gmra.mxu0 %v66
  %v157 = vpop.f32.mrf.mxu0
  %v158 = vadd.f32 %v21, %v157
  %159 = vmatmul.f32.gmra.mxu0 %v69
  %v160 = vpop.f32.mrf.mxu0
  %v161 = vadd.f32 %v22, %v160
  %162 = vmatmul.f32.gmra.mxu0 %v72
  %v163 = vpop.f32.mrf.mxu0
  %v164 = vadd.f32 %v23, %v163
  %165 = vmatmul.f32.gmra.mxu0 %v75
  %v166 = vpop.f32.mrf.mxu0
  %v167 = vadd.f32 %v24, %v166
  %168 = vmatmul.f32.gmra.mxu0 %v78
  %v169 = vpop.f32.mrf.mxu0
  %v170 = vadd.f32 %v25, %v169
  %171 = vmatmul.f32.gmra.mxu0 %v81
  %v172 = vpop.f32.mrf.mxu0
  %v173 = vadd.f32 %v26, %v172
  %174 = vmatmul.f32.gmra.mxu0 %v84
  %v175 = vpop.f32.mrf.mxu0
  %v176 = vadd.f32 %v27, %v175
  %177 = vmatmul.f32.gmra.mxu0 %v87
  %v178 = vpop.f32.mrf.mxu0
  %v179 = vadd.f32 %v28, %v178
  %180 = vmatmul.f32.gmra.mxu0 %v90
  %v181 = vpop.f32.mrf.mxu0
  %v182 = vadd.f32 %v29, %v181
  %183 = vmatmul.f32.gmra.mxu0 %v93
  %v184 = vpop.f32.mrf.mxu0
  %v185 = vadd.f32 %v30, %v184
  %186 = vmatmul.f32.gmra.mxu0 %v96
  %v187 = vpop.f32.mrf.mxu0
  %v188 = vadd.f32 %v31, %v187
  %189 = vmatmul.f32.gmra.mxu0 %v99
  %v190 = vpop.f32.mrf.mxu0
  %v191 = vadd.f32 %v32, %v190
  %192 = vmatmul.f32.gmra.mxu0 %v102
  %v193 = vpop.f32.mrf.mxu0
  %v194 = vadd.f32 %v33, %v193
  %195 = vmatmul.f32.gmra.mxu0 %v105
  %v196 = vpop.f32.mrf.mxu0
  %v197 = vadd.f32 %v34, %v196
  %198 = vmatmul.f32.gmra.mxu0 %v108
  %v199 = vpop.f32.mrf.mxu0
  %v200 = vadd.f32 %v35, %v199
  %201 = vmatmul.f32.gmra.mxu0 %v111
  %v202 = vpop.f32.mrf.mxu0
  %v203 = vadd.f32 %v36, %v202
  %204 = vmatmul.f32.gmra.mxu0 %v114
  %v205 = vpop.f32.mrf.mxu0
  %v206 = vadd.f32 %v37, %v205
  %207 = vmatmul.f32.gmra.mxu0 %v117
  %v208 = vpop.f32.mrf.mxu0
  %v209 = vadd.f32 %v38, %v208
  %210 = vdwg.mxu0
  %v211 = vld [vmem:[%s2] sm:$0x1]
  %v213 = vperm.slane %v211, 0
  %v215 = vadd.f32 %v137, %v213
  %v216 = vadd.f32 %v140, %v213
  %v217 = vadd.f32 %v143, %v213
  %v218 = vadd.f32 %v146, %v213
  %v219 = vadd.f32 %v149, %v213
  %v220 = vadd.f32 %v152, %v213
  %v221 = vadd.f32 %v155, %v213
  %v222 = vadd.f32 %v158, %v213
  %v223 = vadd.f32 %v161, %v213
  %v224 = vadd.f32 %v164, %v213
  %v225 = vadd.f32 %v167, %v213
  %v226 = vadd.f32 %v170, %v213
  %v227 = vadd.f32 %v173, %v213
  %v228 = vadd.f32 %v176, %v213
  %v229 = vadd.f32 %v179, %v213
  %v230 = vadd.f32 %v182, %v213
  %v231 = vadd.f32 %v185, %v213
  %v232 = vadd.f32 %v188, %v213
  %v233 = vadd.f32 %v191, %v213
  %v234 = vadd.f32 %v194, %v213
  %v235 = vadd.f32 %v197, %v213
  %v236 = vadd.f32 %v200, %v213
  %v237 = vadd.f32 %v203, %v213
  %v238 = vadd.f32 %v206, %v213
  %v239 = vadd.f32 %v209, %v213
  %v240 = vmax.f32 %v215, 0.0
  %v241 = vmax.f32 %v216, 0.0
  %v242 = vmax.f32 %v217, 0.0
  %v243 = vmax.f32 %v218, 0.0
  %v244 = vmax.f32 %v219, 0.0
  %v245 = vmax.f32 %v220, 0.0
  %v246 = vmax.f32 %v221, 0.0
  %v247 = vmax.f32 %v222, 0.0
  %v248 = vmax.f32 %v223, 0.0
  %v249 = vmax.f32 %v224, 0.0
  %v250 = vmax.f32 %v225, 0.0
  %v251 = vmax.f32 %v226, 0.0
  %v252 = vmax.f32 %v227, 0.0
  %v253 = vmax.f32 %v228, 0.0
  %v254 = vmax.f32 %v229, 0.0
  %v255 = vmax.f32 %v230, 0.0
  %v256 = vmax.f32 %v231, 0.0
  %v257 = vmax.f32 %v232, 0.0
  %v258 = vmax.f32 %v233, 0.0
  %v259 = vmax.f32 %v234, 0.0
  %v260 = vmax.f32 %v235, 0.0
  %v261 = vmax.f32 %v236, 0.0
  %v262 = vmax.f32 %v237, 0.0
  %v263 = vmax.f32 %v238, 0.0
  %v264 = vmax.f32 %v239, 0.0
  %265 = vst.msk [vmem:[%s3] sm:$0xff] %vm43, %v240
  %266 = vst.msk [vmem:[%s3 + $0x8] sm:$0xff] %vm43, %v241
  %267 = vst.msk [vmem:[%s3 + $0x10] sm:$0xff] %vm43, %v242
  %268 = vst.msk [vmem:[%s3 + $0x18] sm:$0xff] %vm43, %v243
  %269 = vst.msk [vmem:[%s3 + $0x20] sm:$0xff] %vm43, %v244
  %270 = vst.msk [vmem:[%s3 + $0x28] sm:$0xff] %vm43, %v245
  %271 = vst.msk [vmem:[%s3 + $0x30] sm:$0xff] %vm43, %v246
  %272 = vst.msk [vmem:[%s3 + $0x38] sm:$0xff] %vm43, %v247
  %273 = vst.msk [vmem:[%s3 + $0x40] sm:$0xff] %vm43, %v248
  %274 = vst.msk [vmem:[%s3 + $0x48] sm:$0xff] %vm43, %v249
  %275 = vst.msk [vmem:[%s3 + $0x50] sm:$0xff] %vm43, %v250
  %276 = vst.msk [vmem:[%s3 + $0x58] sm:$0xff] %vm43, %v251
  %277 = vst.msk [vmem:[%s3 + $0x60] sm:$0xff] %vm43, %v252
  %278 = vst.msk [vmem:[%s3 + $0x68] sm:$0xff] %vm43, %v253
  %279 = vst.msk [vmem:[%s3 + $0x70] sm:$0xff] %vm43, %v254
  %280 = vst.msk [vmem:[%s3 + $0x78] sm:$0xff] %vm43, %v255
  %281 = vst.msk [vmem:[%s3 + $0x80] sm:$0xff] %vm43, %v256
  %282 = vst.msk [vmem:[%s3 + $0x88] sm:$0xff] %vm43, %v257
  %283 = vst.msk [vmem:[%s3 + $0x90] sm:$0xff] %vm43, %v258
  %284 = vst.msk [vmem:[%s3 + $0x98] sm:$0xff] %vm43, %v259
  %285 = vst.msk [vmem:[%s3 + $0xa0] sm:$0xff] %vm43, %v260
  %286 = vst.msk [vmem:[%s3 + $0xa8] sm:$0xff] %vm43, %v261
  %287 = vst.msk [vmem:[%s3 + $0xb0] sm:$0xff] %vm43, %v262
  %288 = vst.msk [vmem:[%s3 + $0xb8] sm:$0xff] %vm43, %v263
  %289 = vst.msk [vmem:[%s3 + $0xc0] sm:$0xff] %vm43, %v264
  // Predicated region
  $region14: #{rgcn_layer_forward.1} parent=0 // pred_check
    _
  $region15: #{rgcn_layer_forward.1} parent=0 // pred_check_branch
    %291 = sbr.rel (0) target = $region17
  $region16: #{rgcn_layer_forward.1} parent=0 // pred_region
    _
  $region17: #{rgcn_layer_forward.1} parent=0 // pred_fallthru
    _
  // Predicated region
  $region18: #{rgcn_layer_forward.1} parent=0 // pred_check
    _
  $region19: #{rgcn_layer_forward.1} parent=0 // pred_check_branch
    %293 = sbr.rel (0) target = $region21
  $region20: #{rgcn_layer_forward.1} parent=0 // pred_region
    _
  $region21: #{rgcn_layer_forward.1} parent=0 // pred_fallthru
    _

</llo_original>
